<compile_context>
chip_gen: v5e
topology: v5e:2x2
jax: 0.10.0
libtpu: 0.0.40
codegen_flags: <defaults>
</compile_context>

<pallas_src>
import math
import functools

import jax
import jax.numpy as jnp
from jax import lax
from jax.experimental import pallas as pl
from jax.experimental.pallas import tpu as pltpu


def _round_up(a, b):
    return (a + b - 1) // b * b


# ---------------------------------------------------------------------------
# Fused kernel. One grid step processes a (tm, in) row tile against the full
# (in, out_pad) weight and writes a lane-dense (tm, out_pad) output tile.
#
#   w_ref  : weight columns pre-scaled by 2*rc*cosh(2*rc*r)   (in, out_pad)  [bf16]
#   sb_ref : sinh(2*rc*r)                                     (1, out_pad)   [f32]
#   k_ref  : 2*weight_g (= 2*||w_col||)                       (1, out_pad)   [f32]
#   d_ref  : column_mask * 0.5 / rc                           (1, out_pad)   [f32]
# ---------------------------------------------------------------------------
def _poincare_linear_kernel(x_ref, w_ref, sb_ref, k_ref, d_ref, o_ref, *, c, proj_eps):
    f32 = jnp.float32
    cf = f32(c)
    maxnorm = f32((1.0 - proj_eps) / math.sqrt(c))

    x = x_ref[...].astype(f32)                          # (tm, in)
    sinh_b = sb_ref[...]                                # (1, out)
    k = k_ref[...]                                      # (1, out)
    d = d_ref[...]                                      # (1, out)

    # ---- unidirectional_poincare_mlr (coefficient-folded form) ----
    x2 = jnp.sum(x * x, axis=-1, keepdims=True)         # f32 cross-lane reduction (XLU)
    cx2 = cf * x2                                        # == ||sqrt(c)*x||^2
    # MXU: bf16 operands (weight pre-cast/pre-scaled in wrapper), f32 accumulation.
    mm = jnp.dot(x.astype(w_ref.dtype), w_ref[...],
                 preferred_element_type=jnp.float32)     # == 2*rc*cosh(drcr) * (x @ z_unit)
    num = mm - (1.0 + cx2) * sinh_b
    den = jnp.maximum(1.0 - cx2, 1e-15)
    t = num * pl.reciprocal(den, approx=True)            # arcsinh argument  (tm, out)

    # ---- y = sinh(2*weight_g * arcsinh(t)) / rc, fused on the EUP ----
    #   arcsinh(|t|) = log(|t| + sqrt(t^2+1));  sinh(k*a) = (e^{ka} - e^{-ka})/2
    # (abs form avoids catastrophic cancellation for large negative t; sinh is odd.)
    abs_t = jnp.abs(t)
    u = abs_t + jnp.sqrt(abs_t * abs_t + 1.0)
    w = jnp.exp(k * jnp.log(u))
    y_mag = (w - pl.reciprocal(w, approx=True)) * d       # d = mask*0.5/rc; padded cols -> exact 0
    y = jnp.where(t >= 0.0, y_mag, -y_mag)                # (tm, out)

    # ---- Mobius-style rescale + ball.projx, all from the single y^2 reduction ----
    y2 = jnp.sum(y * y, axis=-1, keepdims=True)           # (tm, 1)
    s = 1.0 + jnp.sqrt(1.0 + cf * y2)
    inv_s = pl.reciprocal(s, approx=True)
    # clamp iff ||y/s|| > maxnorm  <=>  y2 > (maxnorm*s)^2   (no extra sqrt)
    thr = maxnorm * s
    scale = jnp.where(y2 > thr * thr,
                      maxnorm * lax.rsqrt(jnp.maximum(y2, 1e-30)),
                      inv_s)
    o_ref[...] = (y * scale).astype(o_ref.dtype)


# ---------------------------------------------------------------------------
# Wrapper
# ---------------------------------------------------------------------------
def manifold_linear(x, weight_v_unit, weight_g, bias, *, c=1.0, tm=256,
                    mxu_dtype=jnp.bfloat16):
    """PoincareLinear forward (out_split=1).

    x             : (..., in_features) float32 points inside the Poincare ball
    weight_v_unit : (in_features, out_features) column-normalized weight_v
    weight_g      : (out_features,) column norms
    bias          : (out_features,)
    mxu_dtype     : dtype of the matmul operands (bf16 default; jnp.float32 for
                    accuracy-critical / near-boundary workloads)
    """
    # TODO(synk): out_split > 1 (ball.logmap0/expmap0 + beta rescale) is not implemented;
    # the module's forward hardcodes out_split=1.
    in_dim, out_dim = weight_v_unit.shape
    lead_shape = x.shape[:-1]
    x2d = x.reshape(-1, in_dim)
    n = x2d.shape[0]

    # --- row tiling: tm >= 128 preferred (MXU row fill); pad N, never assert ---
    tm = max(8, _round_up(int(tm), 8))
    tm_eff = min(tm, _round_up(max(n, 1), 128))
    n_pad = _round_up(max(n, 1), tm_eff)
    if n_pad != n:
        x2d = jnp.pad(x2d, ((0, n_pad - n), (0, 0)))

    # --- lane-dense output: pad columns to a multiple of 128 ---
    out_pad = _round_up(out_dim, 128)
    pcols = out_pad - out_dim
    wv = weight_v_unit.astype(jnp.float32)
    wg = weight_g.reshape(-1).astype(jnp.float32)
    r = bias.reshape(-1).astype(jnp.float32)
    if pcols:
        wv = jnp.pad(wv, ((0, 0), (0, pcols)))
        wg = jnp.pad(wg, (0, pcols))
        r = jnp.pad(r, (0, pcols))
    col_mask = (jnp.arange(out_pad) < out_dim).astype(jnp.float32)

    # --- fold per-column constants (param-sized; negligible wrapper cost) ---
    rc = math.sqrt(c)
    drcr = 2.0 * rc * r
    w_scaled = wv * (2.0 * rc * jnp.cosh(drcr))[None, :]    # cosh factor folded into weight
    w_mxu = w_scaled.astype(mxu_dtype)                       # bf16 MXU operand, f32 accumulate
    sb_row = jnp.sinh(drcr).reshape(1, out_pad)
    k_row = (2.0 * wg).reshape(1, out_pad)
    d_row = (col_mask * (0.5 / rc)).reshape(1, out_pad)

    kern = functools.partial(_poincare_linear_kernel, c=float(c), proj_eps=4e-3)

    # --- explicit VMEM budget so the plan also fits v7x's 64 MiB ---
    itemsize = x2d.dtype.itemsize
    io_bytes = tm_eff * in_dim * itemsize + tm_eff * out_pad * itemsize
    w_bytes = in_dim * out_pad * w_mxu.dtype.itemsize
    row_bytes = 3 * out_pad * 4
    temp_bytes = 8 * tm_eff * out_pad * 4                    # f32 temporaries of the tail
    est = 2 * (io_bytes + w_bytes + row_bytes) + temp_bytes
    vmem_limit = int(min(max(2 * est, 32 * 1024 * 1024), 64 * 1024 * 1024))
    # TODO(synk): for very large in_features*out_features (weight >> ~10 MiB) add a K
    # grid axis ("arbitrary") with an f32 mm/cx2 accumulator instead of keeping the
    # full weight resident.

    out2d = pl.pallas_call(
        kern,
        out_shape=jax.ShapeDtypeStruct((n_pad, out_pad), x.dtype),
        grid_spec=pltpu.PrefetchScalarGridSpec(
            num_scalar_prefetch=0,
            grid=(n_pad // tm_eff,),            # parallel rows: shards across v7x's 2 TCs
            in_specs=[
                pl.BlockSpec((tm_eff, in_dim), lambda i: (i, 0)),    # x row tile
                pl.BlockSpec((in_dim, out_pad), lambda i: (0, 0)),   # pre-scaled weight
                pl.BlockSpec((1, out_pad), lambda i: (0, 0)),        # sinh(2*rc*r)
                pl.BlockSpec((1, out_pad), lambda i: (0, 0)),        # 2*weight_g
                pl.BlockSpec((1, out_pad), lambda i: (0, 0)),        # mask*0.5/rc
            ],
            out_specs=pl.BlockSpec((tm_eff, out_pad), lambda i: (i, 0)),
        ),
        compiler_params=pltpu.CompilerParams(
            dimension_semantics=("parallel",),
            vmem_limit_bytes=vmem_limit),
    )(x2d, w_mxu, sb_row, k_row, d_row)

    return out2d[:n, :out_dim].reshape(lead_shape + (out_dim,))


# ---------------------------------------------------------------------------
# Pure-JAX reference (mirror of the PyTorch code) for the correctness check.
# ---------------------------------------------------------------------------
def _reference(x, weight_v_unit, weight_g, bias, c):
    rc = jnp.sqrt(jnp.float32(c))
    drcr = 2.0 * rc * bias
    rcx = rc * x
    cx2 = jnp.sum(rcx ** 2, axis=-1, keepdims=True)
    mm = rcx @ weight_v_unit
    mlr = 2.0 * weight_g / rc * jnp.arcsinh(
        (2.0 * mm * jnp.cosh(drcr) - (1.0 + cx2) * jnp.sinh(drcr))
        / jnp.maximum(1.0 - cx2, 1e-15))
    y = jnp.sinh(rc * mlr) / rc
    y = y / (1.0 + jnp.sqrt(1.0 + c * jnp.sum(y ** 2, axis=-1, keepdims=True)))
    norm = jnp.maximum(jnp.linalg.norm(y, axis=-1, keepdims=True), 1e-15)
    maxnorm = (1.0 - 4e-3) / rc
    return jnp.where(norm > maxnorm, y / norm * maxnorm, y)


if __name__ == "__main__":
    key = jax.random.PRNGKey(0)
    k_x, k_w, k_b = jax.random.split(key, 3)

    batch, seq = 2, 8
    in_features, out_features = 32, 32
    c = 1.0

    # Parameter init mirroring PoincareLinear.__init__ (out_split=1):
    #   weight ~ N(0, (2*in*out)^-0.5); weight_g = ||weight||_col; bias small (trainable).
    std = (2.0 * in_features * out_features) ** (-0.5)
    weight = std * jax.random.normal(k_w, (in_features, out_features), jnp.float32)
    col_norm = jnp.linalg.norm(weight, axis=0)
    weight_g = col_norm
    weight_v_unit = weight / jnp.maximum(col_norm, 1e-15)   # forward normalizes weight_v
    bias = 0.01 * jax.random.normal(k_b, (out_features,), jnp.float32)

    # Inputs: points inside the Poincare ball (small norm).
    x = 0.1 * jax.random.normal(k_x, (batch, seq, in_features), jnp.float32)

    ref = _reference(x, weight_v_unit, weight_g, bias, c)

    # Default fast path: bf16 MXU operands, f32 accumulation, f32 vector tail.
    out = jax.block_until_ready(manifold_linear(x, weight_v_unit, weight_g, bias, c=c))
    assert out.shape == (batch, seq, out_features)
    assert jnp.allclose(out, ref, atol=2.5e-3, rtol=2.5e-3), "bf16-MXU path mismatch vs reference"

    # Full-f32 MXU path (for accuracy-critical / near-boundary workloads).
    out_f32 = jax.block_until_ready(
        manifold_linear(x, weight_v_unit, weight_g, bias, c=c, mxu_dtype=jnp.float32))
    assert jnp.allclose(out_f32, ref, atol=1e-3, rtol=1e-3), "f32-MXU path mismatch vs reference"

    print("KERNEL_OK")
</pallas_src>

<mosaic_0001>
module attributes {stable_mosaic.version = 11 : i64} {
  func.func @_poincare_linear_kernel(%arg0: i32, %arg1: memref<128x32xf32, #tpu.memory_space<vmem>>, %arg2: memref<32x128xbf16, #tpu.memory_space<vmem>>, %arg3: memref<1x128xf32, #tpu.memory_space<vmem>>, %arg4: memref<1x128xf32, #tpu.memory_space<vmem>>, %arg5: memref<1x128xf32, #tpu.memory_space<vmem>>, %arg6: memref<128x128xf32, #tpu.memory_space<vmem>>) attributes {dimension_semantics = [#tpu.dimension_semantics<parallel>], iteration_bounds = array<i64: 1>, scalar_prefetch = 0 : i64, scratch_operands = 0 : i64, tpu.core_type = #tpu.core_type<tc>, window_params = [{transform_indices = @transform_0, window_bounds = array<i64: 128, 32>}, {pipeline_mode = #tpu.pipeline_mode<synchronous>, transform_indices = @transform_1, window_bounds = array<i64: 32, 128>}, {pipeline_mode = #tpu.pipeline_mode<synchronous>, transform_indices = @transform_2, window_bounds = array<i64: 1, 128>}, {pipeline_mode = #tpu.pipeline_mode<synchronous>, transform_indices = @transform_3, window_bounds = array<i64: 1, 128>}, {pipeline_mode = #tpu.pipeline_mode<synchronous>, transform_indices = @transform_4, window_bounds = array<i64: 1, 128>}, {transform_indices = @transform_5, window_bounds = array<i64: 128, 128>}]} {
    %c0 = arith.constant 0 : index
    %c0_0 = arith.constant 0 : index
    %0 = vector.load %arg1[%c0, %c0_0] : memref<128x32xf32, #tpu.memory_space<vmem>>, vector<128x32xf32>
    %c0_1 = arith.constant 0 : index
    %c0_2 = arith.constant 0 : index
    %1 = vector.load %arg3[%c0_1, %c0_2] : memref<1x128xf32, #tpu.memory_space<vmem>>, vector<1x128xf32>
    %c0_3 = arith.constant 0 : index
    %c0_4 = arith.constant 0 : index
    %2 = vector.load %arg4[%c0_3, %c0_4] : memref<1x128xf32, #tpu.memory_space<vmem>>, vector<1x128xf32>
    %c0_5 = arith.constant 0 : index
    %c0_6 = arith.constant 0 : index
    %3 = vector.load %arg5[%c0_5, %c0_6] : memref<1x128xf32, #tpu.memory_space<vmem>>, vector<1x128xf32>
    %4 = arith.mulf %0, %0 : vector<128x32xf32>
    %cst = arith.constant dense<0.000000e+00> : vector<128xf32>
    %5 = vector.multi_reduction <add>, %4, %cst [1] : vector<128x32xf32> to vector<128xf32>
    %6 = vector.shape_cast %5 : vector<128xf32> to vector<128x1xf32>
    %cst_7 = arith.constant 1.000000e+00 : f32
    %7 = vector.broadcast %cst_7 : f32 to vector<128x1xf32>
    %8 = arith.mulf %7, %6 : vector<128x1xf32>
    %9 = arith.truncf %0 : vector<128x32xf32> to vector<128x32xbf16>
    %c0_8 = arith.constant 0 : index
    %c0_9 = arith.constant 0 : index
    %10 = vector.load %arg2[%c0_8, %c0_9] : memref<32x128xbf16, #tpu.memory_space<vmem>>, vector<32x128xbf16>
    %cst_10 = arith.constant dense<0.000000e+00> : vector<128x128xf32>
    %11 = tpu.matmul %9, %10, %cst_10 {dimension_numbers = #tpu.dot_dimension_numbers<[1], [0], [0], [1], [0, 0, 1, 1], [], []>} : vector<128x32xbf16>, vector<32x128xbf16>, vector<128x128xf32> -> vector<128x128xf32>
    %cst_11 = arith.constant 1.000000e+00 : f32
    %12 = vector.broadcast %cst_11 : f32 to vector<128x1xf32>
    %13 = arith.addf %12, %8 : vector<128x1xf32>
    %14 = vector.broadcast %13 : vector<128x1xf32> to vector<128x128xf32>
    %15 = vector.broadcast %1 : vector<1x128xf32> to vector<128x128xf32>
    %16 = arith.mulf %14, %15 : vector<128x128xf32>
    %17 = arith.subf %11, %16 : vector<128x128xf32>
    %cst_12 = arith.constant 1.000000e+00 : f32
    %18 = vector.broadcast %cst_12 : f32 to vector<128x1xf32>
    %19 = arith.subf %18, %8 : vector<128x1xf32>
    %cst_13 = arith.constant 1.000000e-15 : f32
    %20 = vector.broadcast %cst_13 : f32 to vector<128x1xf32>
    %21 = arith.maximumf %19, %20 : vector<128x1xf32>
    %22 = tpu.reciprocal %21 {approx = true} : vector<128x1xf32> -> vector<128x1xf32>
    %23 = vector.broadcast %22 : vector<128x1xf32> to vector<128x128xf32>
    %24 = arith.mulf %17, %23 : vector<128x128xf32>
    %25 = math.absf %24 : vector<128x128xf32>
    %26 = arith.mulf %25, %25 : vector<128x128xf32>
    %cst_14 = arith.constant 1.000000e+00 : f32
    %27 = vector.broadcast %cst_14 : f32 to vector<128x128xf32>
    %28 = arith.addf %26, %27 : vector<128x128xf32>
    %29 = math.sqrt %28 : vector<128x128xf32>
    %30 = arith.addf %25, %29 : vector<128x128xf32>
    %31 = math.log %30 : vector<128x128xf32>
    %32 = vector.broadcast %2 : vector<1x128xf32> to vector<128x128xf32>
    %33 = arith.mulf %32, %31 : vector<128x128xf32>
    %34 = math.exp %33 : vector<128x128xf32>
    %35 = tpu.reciprocal %34 {approx = true} : vector<128x128xf32> -> vector<128x128xf32>
    %36 = arith.subf %34, %35 : vector<128x128xf32>
    %37 = vector.broadcast %3 : vector<1x128xf32> to vector<128x128xf32>
    %38 = arith.mulf %36, %37 : vector<128x128xf32>
    %cst_15 = arith.constant 0.000000e+00 : f32
    %39 = vector.broadcast %cst_15 : f32 to vector<128x128xf32>
    %40 = arith.cmpf oge, %24, %39 : vector<128x128xf32>
    %cst_16 = arith.constant 0.000000e+00 : f32
    %41 = vector.broadcast %cst_16 : f32 to vector<128x128xf32>
    %42 = arith.subf %41, %38 : vector<128x128xf32>
    %43 = arith.select %40, %38, %42 : vector<128x128xi1>, vector<128x128xf32>
    %44 = arith.mulf %43, %43 : vector<128x128xf32>
    %cst_17 = arith.constant dense<0.000000e+00> : vector<128xf32>
    %45 = vector.multi_reduction <add>, %44, %cst_17 [1] : vector<128x128xf32> to vector<128xf32>
    %46 = vector.shape_cast %45 : vector<128xf32> to vector<128x1xf32>
    %cst_18 = arith.constant 1.000000e+00 : f32
    %47 = vector.broadcast %cst_18 : f32 to vector<128x1xf32>
    %48 = arith.mulf %47, %46 : vector<128x1xf32>
    %cst_19 = arith.constant 1.000000e+00 : f32
    %49 = vector.broadcast %cst_19 : f32 to vector<128x1xf32>
    %50 = arith.addf %49, %48 : vector<128x1xf32>
    %51 = math.sqrt %50 : vector<128x1xf32>
    %cst_20 = arith.constant 1.000000e+00 : f32
    %52 = vector.broadcast %cst_20 : f32 to vector<128x1xf32>
    %53 = arith.addf %52, %51 : vector<128x1xf32>
    %54 = tpu.reciprocal %53 {approx = true} : vector<128x1xf32> -> vector<128x1xf32>
    %cst_21 = arith.constant 0.995999991 : f32
    %55 = vector.broadcast %cst_21 : f32 to vector<128x1xf32>
    %56 = arith.mulf %55, %53 : vector<128x1xf32>
    %57 = arith.mulf %56, %56 : vector<128x1xf32>
    %58 = arith.cmpf ogt, %46, %57 : vector<128x1xf32>
    %cst_22 = arith.constant 1.000000e-30 : f32
    %59 = vector.broadcast %cst_22 : f32 to vector<128x1xf32>
    %60 = arith.maximumf %46, %59 : vector<128x1xf32>
    %61 = math.rsqrt %60 : vector<128x1xf32>
    %cst_23 = arith.constant 0.995999991 : f32
    %62 = vector.broadcast %cst_23 : f32 to vector<128x1xf32>
    %63 = arith.mulf %62, %61 : vector<128x1xf32>
    %64 = arith.select %58, %63, %54 : vector<128x1xi1>, vector<128x1xf32>
    %65 = vector.broadcast %64 : vector<128x1xf32> to vector<128x128xf32>
    %66 = arith.mulf %43, %65 : vector<128x128xf32>
    %c0_24 = arith.constant 0 : index
    %c0_25 = arith.constant 0 : index
    %67 = vector.load %arg6[%c0_24, %c0_25] : memref<128x128xf32, #tpu.memory_space<vmem>>, vector<128x128xf32>
    tpu.vector_store %arg6[%c0_24, %c0_25], %66 {strides = array<i32>} : memref<128x128xf32, #tpu.memory_space<vmem>>, vector<128x128xf32>,
    return
  }
  func.func @transform_0(%arg0: i32) -> (i32, i32) {
    %c0_i32 = arith.constant 0 : i32
    %c0_i32_0 = arith.constant 0 : i32
    return %arg0, %c0_i32 : i32, i32
  }
  func.func @transform_1(%arg0: i32) -> (i32, i32) {
    %c0_i32 = arith.constant 0 : i32
    %c0_i32_0 = arith.constant 0 : i32
    %c0_i32_1 = arith.constant 0 : i32
    return %c0_i32, %c0_i32_0 : i32, i32
  }
  func.func @transform_2(%arg0: i32) -> (i32, i32) {
    %c0_i32 = arith.constant 0 : i32
    %c0_i32_0 = arith.constant 0 : i32
    %c0_i32_1 = arith.constant 0 : i32
    return %c0_i32, %c0_i32_0 : i32, i32
  }
  func.func @transform_3(%arg0: i32) -> (i32, i32) {
    %c0_i32 = arith.constant 0 : i32
    %c0_i32_0 = arith.constant 0 : i32
    %c0_i32_1 = arith.constant 0 : i32
    return %c0_i32, %c0_i32_0 : i32, i32
  }
  func.func @transform_4(%arg0: i32) -> (i32, i32) {
    %c0_i32 = arith.constant 0 : i32
    %c0_i32_0 = arith.constant 0 : i32
    %c0_i32_1 = arith.constant 0 : i32
    return %c0_i32, %c0_i32_0 : i32, i32
  }
  func.func @transform_5(%arg0: i32) -> (i32, i32) {
    %c0_i32 = arith.constant 0 : i32
    %c0_i32_0 = arith.constant 0 : i32
    return %arg0, %c0_i32 : i32, i32
  }
}

</mosaic_0001>

<llo_original>
// kernel: tpu_custom_call.1
$region0: #{tpu_custom_call.1}
  #allocation0 [shape = 'u32[]', space=smem, size = 0x4, offset = 0x4, fixed_abs, tag = 'smem constant byte address 0x4 - core index']
  #allocation1 [shape = 'u32[72,128]{1,0:T(1,128)}', space=vmem, size = 0x9000, scoped, tag = 'internal scratch']
  %s0 = inlined_call_operand.vmem [shape: f32[128,32], index: 0, kind: input, shape index: {}]
  %s1 = inlined_call_operand.vmem [shape: bf16[32,128], index: 1, kind: input, shape index: {}]
  %s2 = inlined_call_operand.vmem [shape: f32[1,128], index: 2, kind: input, shape index: {}]
  %s3 = inlined_call_operand.vmem [shape: f32[1,128], index: 3, kind: input, shape index: {}]
  %s4 = inlined_call_operand.vmem [shape: f32[1,128], index: 4, kind: input, shape index: {}]
  %s5 = inlined_call_operand.hbm [shape: f32[128,128], index: 5, kind: output, shape index: {}]
  %s6 = sld [smem:[#allocation0]]
  $region30: #{tpu_custom_call.1} parent=0
    _
  %s8 = ssub.s32 1, %s6
  %s9 = scalar_select 0, %s8, %s6
  $region1: #{tpu_custom_call.1} parent=0
    #allocation2 [shape = 'u8[65536]{0}', space=vmem, size = 0x10000, scoped, tag = 'output window, operand 0, single buffered']
    #allocation3 [shape = 's32[1]{0}', space=sflag, size = 0x4, scoped, tag = 'scoped memory for tpu_custom_call.1']
    %10 = vsyncpa [#allocation3], 0
    // Predicated region
    $region2: #{tpu_custom_call.1} parent=1 // pred_check
      _
    $region3: #{tpu_custom_call.1} parent=1 // pred_check_branch
      %12 = sbr.rel (0) target = $region5
    $region4: #{tpu_custom_call.1} parent=1 // pred_region
      _
    $region5: #{tpu_custom_call.1} parent=1 // pred_fallthru
      _
    // Predicated region
    $region6: #{tpu_custom_call.1} parent=1 // pred_check
      _
    $region7: #{tpu_custom_call.1} parent=1 // pred_check_branch
      %14 = sbr.rel (0) target = $region9
    $region8: #{tpu_custom_call.1} parent=1 // pred_region
      _
    $region9: #{tpu_custom_call.1} parent=1 // pred_fallthru
      _
    // Predicated region
    $region10: #{tpu_custom_call.1} parent=1 // pred_check
      _
    $region11: #{tpu_custom_call.1} parent=1 // pred_check_branch
      %16 = sbr.rel (0) target = $region13
    $region12: #{tpu_custom_call.1} parent=1 // pred_region
      _
    $region13: #{tpu_custom_call.1} parent=1 // pred_fallthru
      _
    // Predicated region
    $region14: #{tpu_custom_call.1} parent=1 // pred_check
      _
    $region15: #{tpu_custom_call.1} parent=1 // pred_check_branch
      %18 = sbr.rel (0) target = $region17
    $region16: #{tpu_custom_call.1} parent=1 // pred_region
      _
    $region17: #{tpu_custom_call.1} parent=1 // pred_fallthru
      _
    // Predicated region
    $region18: #{tpu_custom_call.1} parent=1 // pred_check
      _
    $region19: #{tpu_custom_call.1} parent=1 // pred_check_branch
      %20 = sbr.rel (0) target = $region21
    $region20: #{tpu_custom_call.1} parent=1 // pred_region
      _
    $region21: #{tpu_custom_call.1} parent=1 // pred_fallthru
      _
    %v22 = vld [vmem:[%s0] sm:$0xff]
    %v23 = vld [vmem:[%s0 + $0x8] sm:$0xff]
    %v24 = vld [vmem:[%s0 + $0x10] sm:$0xff]
    %v25 = vld [vmem:[%s0 + $0x18] sm:$0xff]
    %v26 = vld [vmem:[%s0 + $0x20] sm:$0xff]
    %v27 = vld [vmem:[%s0 + $0x28] sm:$0xff]
    %v28 = vld [vmem:[%s0 + $0x30] sm:$0xff]
    %v29 = vld [vmem:[%s0 + $0x38] sm:$0xff]
    %v30 = vld [vmem:[%s0 + $0x40] sm:$0xff]
    %v31 = vld [vmem:[%s0 + $0x48] sm:$0xff]
    %v32 = vld [vmem:[%s0 + $0x50] sm:$0xff]
    %v33 = vld [vmem:[%s0 + $0x58] sm:$0xff]
    %v34 = vld [vmem:[%s0 + $0x60] sm:$0xff]
    %v35 = vld [vmem:[%s0 + $0x68] sm:$0xff]
    %v36 = vld [vmem:[%s0 + $0x70] sm:$0xff]
    %v37 = vld [vmem:[%s0 + $0x78] sm:$0xff]
    %v38 = vld [vmem:[%s2] sm:$0x1]
    %v39 = vld [vmem:[%s3] sm:$0x1]
    %v40 = vld [vmem:[%s4] sm:$0x1]
    %v41 = vmul.f32 %v22, %v22
    %v42 = vmul.f32 %v23, %v23
    %v43 = vmul.f32 %v24, %v24
    %v44 = vmul.f32 %v25, %v25
    %v45 = vmul.f32 %v26, %v26
    %v46 = vmul.f32 %v27, %v27
    %v47 = vmul.f32 %v28, %v28
    %v48 = vmul.f32 %v29, %v29
    %v49 = vmul.f32 %v30, %v30
    %v50 = vmul.f32 %v31, %v31
    %v51 = vmul.f32 %v32, %v32
    %v52 = vmul.f32 %v33, %v33
    %v53 = vmul.f32 %v34, %v34
    %v54 = vmul.f32 %v35, %v35
    %v55 = vmul.f32 %v36, %v36
    %v56 = vmul.f32 %v37, %v37
    %vm57 = vcmask 261120
    %v58 = vsel %vm57, %v41, 0.0
    %59 = vadd.xlane.f32.xlu0 %v58
    %v60 = vpop.xlane.xlu0 %59
    %v61 = vsel %vm57, %v42, 0.0
    %62 = vadd.xlane.f32.xlu0 %v61
    %v63 = vpop.xlane.xlu0 %62
    %v64 = vsel %vm57, %v43, 0.0
    %65 = vadd.xlane.f32.xlu0 %v64
    %v66 = vpop.xlane.xlu0 %65
    %v67 = vsel %vm57, %v44, 0.0
    %68 = vadd.xlane.f32.xlu0 %v67
    %v69 = vpop.xlane.xlu0 %68
    %v70 = vsel %vm57, %v45, 0.0
    %71 = vadd.xlane.f32.xlu0 %v70
    %v72 = vpop.xlane.xlu0 %71
    %v73 = vsel %vm57, %v46, 0.0
    %74 = vadd.xlane.f32.xlu0 %v73
    %v75 = vpop.xlane.xlu0 %74
    %v76 = vsel %vm57, %v47, 0.0
    %77 = vadd.xlane.f32.xlu0 %v76
    %v78 = vpop.xlane.xlu0 %77
    %v79 = vsel %vm57, %v48, 0.0
    %80 = vadd.xlane.f32.xlu0 %v79
    %v81 = vpop.xlane.xlu0 %80
    %v82 = vsel %vm57, %v49, 0.0
    %83 = vadd.xlane.f32.xlu0 %v82
    %v84 = vpop.xlane.xlu0 %83
    %v85 = vsel %vm57, %v50, 0.0
    %86 = vadd.xlane.f32.xlu0 %v85
    %v87 = vpop.xlane.xlu0 %86
    %v88 = vsel %vm57, %v51, 0.0
    %89 = vadd.xlane.f32.xlu0 %v88
    %v90 = vpop.xlane.xlu0 %89
    %v91 = vsel %vm57, %v52, 0.0
    %92 = vadd.xlane.f32.xlu0 %v91
    %v93 = vpop.xlane.xlu0 %92
    %v94 = vsel %vm57, %v53, 0.0
    %95 = vadd.xlane.f32.xlu0 %v94
    %v96 = vpop.xlane.xlu0 %95
    %v97 = vsel %vm57, %v54, 0.0
    %98 = vadd.xlane.f32.xlu0 %v97
    %v99 = vpop.xlane.xlu0 %98
    %v100 = vsel %vm57, %v55, 0.0
    %101 = vadd.xlane.f32.xlu0 %v100
    %v102 = vpop.xlane.xlu0 %101
    %v103 = vsel %vm57, %v56, 0.0
    %104 = vadd.xlane.f32.xlu0 %v103
    %v105 = vpop.xlane.xlu0 %104
    %v106 = vpack.c.bf16 %v23, %v22
    %v107 = vpack.c.bf16 %v25, %v24
    %v108 = vpack.c.bf16 %v27, %v26
    %v109 = vpack.c.bf16 %v29, %v28
    %v110 = vpack.c.bf16 %v31, %v30
    %v111 = vpack.c.bf16 %v33, %v32
    %v112 = vpack.c.bf16 %v35, %v34
    %v113 = vpack.c.bf16 %v37, %v36
    %v114 = vld [vmem:[%s1] sm:$0xf]
    %v115 = vld [vmem:[%s1 + $0x4] sm:$0xf]
    %v116 = vld [vmem:[%s1 + $0x8] sm:$0xf]
    %v117 = vld [vmem:[%s1 + $0xc] sm:$0xf]
    %v122 = vunpack.c.l.b16 %v114
    %v123 = vunpack.c.l.b16 %v115
    %v124 = vunpack.c.l.b16 %v116
    %v125 = vunpack.c.l.b16 %v117
    %v126 = vpack.c.b16 %v123, %v122
    %v127 = vpack.c.b16 %v125, %v124
    %v131 = vsel %vm57, %v106, 0
    %v134 = vsel %vm57, %v107, 0
    %v137 = vsel %vm57, %v108, 0
    %v140 = vsel %vm57, %v109, 0
    %v143 = vsel %vm57, %v110, 0
    %v146 = vsel %vm57, %v111, 0
    %v149 = vsel %vm57, %v112, 0
    %v152 = vsel %vm57, %v113, 0
    %154 = vmatpush.bf16.msra.mxu0 0
    %155 = vmatpush.bf16.msra.mxu0 0
    %156 = vmatpush.bf16.msra.mxu0 0
    %157 = vmatpush.bf16.msra.mxu0 0
    %158 = vmatpush.bf16.msra.mxu0 0
    %159 = vmatpush.bf16.msra.mxu0 0
    %160 = vmatpush.bf16.msra.mxu0 %v127
    %161 = vmatpush.bf16.msra.mxu0 %v126
    %162 = vmatmul.bf16.gmra.mxu0 %v131
    %v163 = vpop.f32.mrf.mxu0
    %v164 = vadd.f32 0.0, %v163
    %v165 = vpop.f32.mrf.mxu0
    %v166 = vadd.f32 0.0, %v165
    %167 = vmatmul.bf16.gmra.mxu0 %v134
    %v168 = vpop.f32.mrf.mxu0
    %v169 = vadd.f32 0.0, %v168
    %v170 = vpop.f32.mrf.mxu0
    %v171 = vadd.f32 0.0, %v170
    %172 = vmatmul.bf16.gmra.mxu0 %v137
    %v173 = vpop.f32.mrf.mxu0
    %v174 = vadd.f32 0.0, %v173
    %v175 = vpop.f32.mrf.mxu0
    %v176 = vadd.f32 0.0, %v175
    %177 = vmatmul.bf16.gmra.mxu0 %v140
    %v178 = vpop.f32.mrf.mxu0
    %v179 = vadd.f32 0.0, %v178
    %v180 = vpop.f32.mrf.mxu0
    %v181 = vadd.f32 0.0, %v180
    %182 = vmatmul.bf16.gmra.mxu0 %v143
    %v183 = vpop.f32.mrf.mxu0
    %v184 = vadd.f32 0.0, %v183
    %v185 = vpop.f32.mrf.mxu0
    %v186 = vadd.f32 0.0, %v185
    %187 = vmatmul.bf16.gmra.mxu0 %v146
    %v188 = vpop.f32.mrf.mxu0
    %v189 = vadd.f32 0.0, %v188
    %v190 = vpop.f32.mrf.mxu0
    %v191 = vadd.f32 0.0, %v190
    %192 = vmatmul.bf16.gmra.mxu0 %v149
    %v193 = vpop.f32.mrf.mxu0
    %v194 = vadd.f32 0.0, %v193
    %v195 = vpop.f32.mrf.mxu0
    %v196 = vadd.f32 0.0, %v195
    %197 = vmatmul.bf16.gmra.mxu0 %v152
    %v198 = vpop.f32.mrf.mxu0
    %v199 = vadd.f32 0.0, %v198
    %v200 = vpop.f32.mrf.mxu0
    %v201 = vadd.f32 0.0, %v200
    %202 = vdwg.mxu0
    %v203 = vadd.f32 %v60, 1.0
    %v204 = vadd.f32 %v63, 1.0
    %v205 = vadd.f32 %v66, 1.0
    %v206 = vadd.f32 %v69, 1.0
    %v207 = vadd.f32 %v72, 1.0
    %v208 = vadd.f32 %v75, 1.0
    %v209 = vadd.f32 %v78, 1.0
    %v210 = vadd.f32 %v81, 1.0
    %v211 = vadd.f32 %v84, 1.0
    %v212 = vadd.f32 %v87, 1.0
    %v213 = vadd.f32 %v90, 1.0
    %v214 = vadd.f32 %v93, 1.0
    %v215 = vadd.f32 %v96, 1.0
    %v216 = vadd.f32 %v99, 1.0
    %v217 = vadd.f32 %v102, 1.0
    %v218 = vadd.f32 %v105, 1.0
    %v220 = vperm.slane %v38, 0
    %v222 = vmul.f32 %v203, %v220
    %v223 = vmul.f32 %v204, %v220
    %v224 = vmul.f32 %v205, %v220
    %v225 = vmul.f32 %v206, %v220
    %v226 = vmul.f32 %v207, %v220
    %v227 = vmul.f32 %v208, %v220
    %v228 = vmul.f32 %v209, %v220
    %v229 = vmul.f32 %v210, %v220
    %v230 = vmul.f32 %v211, %v220
    %v231 = vmul.f32 %v212, %v220
    %v232 = vmul.f32 %v213, %v220
    %v233 = vmul.f32 %v214, %v220
    %v234 = vmul.f32 %v215, %v220
    %v235 = vmul.f32 %v216, %v220
    %v236 = vmul.f32 %v217, %v220
    %v237 = vmul.f32 %v218, %v220
    %v238 = vsub.f32 %v164, %v222
    %v239 = vsub.f32 %v166, %v223
    %v240 = vsub.f32 %v169, %v224
    %v241 = vsub.f32 %v171, %v225
    %v242 = vsub.f32 %v174, %v226
    %v243 = vsub.f32 %v176, %v227
    %v244 = vsub.f32 %v179, %v228
    %v245 = vsub.f32 %v181, %v229
    %v246 = vsub.f32 %v184, %v230
    %v247 = vsub.f32 %v186, %v231
    %v248 = vsub.f32 %v189, %v232
    %v249 = vsub.f32 %v191, %v233
    %v250 = vsub.f32 %v194, %v234
    %v251 = vsub.f32 %v196, %v235
    %v252 = vsub.f32 %v199, %v236
    %v253 = vsub.f32 %v201, %v237
    %v254 = vsub.f32 1.0, %v60
    %v255 = vsub.f32 1.0, %v63
    %v256 = vsub.f32 1.0, %v66
    %v257 = vsub.f32 1.0, %v69
    %v258 = vsub.f32 1.0, %v72
    %v259 = vsub.f32 1.0, %v75
    %v260 = vsub.f32 1.0, %v78
    %v261 = vsub.f32 1.0, %v81
    %v262 = vsub.f32 1.0, %v84
    %v263 = vsub.f32 1.0, %v87
    %v264 = vsub.f32 1.0, %v90
    %v265 = vsub.f32 1.0, %v93
    %v266 = vsub.f32 1.0, %v96
    %v267 = vsub.f32 1.0, %v99
    %v268 = vsub.f32 1.0, %v102
    %v269 = vsub.f32 1.0, %v105
    %v270 = vmax.f32 %v254, 1e-15
    %v271 = vmax.f32 %v255, 1e-15
    %v272 = vmax.f32 %v256, 1e-15
    %v273 = vmax.f32 %v257, 1e-15
    %v274 = vmax.f32 %v258, 1e-15
    %v275 = vmax.f32 %v259, 1e-15
    %v276 = vmax.f32 %v260, 1e-15
    %v277 = vmax.f32 %v261, 1e-15
    %v278 = vmax.f32 %v262, 1e-15
    %v279 = vmax.f32 %v263, 1e-15
    %v280 = vmax.f32 %v264, 1e-15
    %v281 = vmax.f32 %v265, 1e-15
    %v282 = vmax.f32 %v266, 1e-15
    %v283 = vmax.f32 %v267, 1e-15
    %v284 = vmax.f32 %v268, 1e-15
    %v285 = vmax.f32 %v269, 1e-15
    %v286 = vrcp.pop %v270
    %v287 = vrcp.pop %v271
    %v288 = vrcp.pop %v272
    %v289 = vrcp.pop %v273
    %v290 = vrcp.pop %v274
    %v291 = vrcp.pop %v275
    %v292 = vrcp.pop %v276
    %v293 = vrcp.pop %v277
    %v294 = vrcp.pop %v278
    %v295 = vrcp.pop %v279
    %v296 = vrcp.pop %v280
    %v297 = vrcp.pop %v281
    %v298 = vrcp.pop %v282
    %v299 = vrcp.pop %v283
    %v300 = vrcp.pop %v284
    %v301 = vrcp.pop %v285
    %v302 = vmul.f32 %v238, %v286
    %v303 = vmul.f32 %v239, %v287
    %v304 = vmul.f32 %v240, %v288
    %v305 = vmul.f32 %v241, %v289
    %v306 = vmul.f32 %v242, %v290
    %v307 = vmul.f32 %v243, %v291
    %v308 = vmul.f32 %v244, %v292
    %v309 = vmul.f32 %v245, %v293
    %v310 = vmul.f32 %v246, %v294
    %v311 = vmul.f32 %v247, %v295
    %v312 = vmul.f32 %v248, %v296
    %v313 = vmul.f32 %v249, %v297
    %v314 = vmul.f32 %v250, %v298
    %v315 = vmul.f32 %v251, %v299
    %v316 = vmul.f32 %v252, %v300
    %v317 = vmul.f32 %v253, %v301
    %v318 = vand.u32 2147483647, %v302
    %v319 = vand.u32 2147483647, %v303
    %v320 = vand.u32 2147483647, %v304
    %v321 = vand.u32 2147483647, %v305
    %v322 = vand.u32 2147483647, %v306
    %v323 = vand.u32 2147483647, %v307
    %v324 = vand.u32 2147483647, %v308
    %v325 = vand.u32 2147483647, %v309
    %v326 = vand.u32 2147483647, %v310
    %v327 = vand.u32 2147483647, %v311
    %v328 = vand.u32 2147483647, %v312
    %v329 = vand.u32 2147483647, %v313
    %v330 = vand.u32 2147483647, %v314
    %v331 = vand.u32 2147483647, %v315
    %v332 = vand.u32 2147483647, %v316
    %v333 = vand.u32 2147483647, %v317
    %v334 = vmul.f32 %v318, %v318
    %v335 = vmul.f32 %v319, %v319
    %v336 = vmul.f32 %v320, %v320
    %v337 = vmul.f32 %v321, %v321
    %v338 = vmul.f32 %v322, %v322
    %v339 = vmul.f32 %v323, %v323
    %v340 = vmul.f32 %v324, %v324
    %v341 = vmul.f32 %v325, %v325
    %v342 = vmul.f32 %v326, %v326
    %v343 = vmul.f32 %v327, %v327
    %v344 = vmul.f32 %v328, %v328
    %v345 = vmul.f32 %v329, %v329
    %v346 = vmul.f32 %v330, %v330
    %v347 = vmul.f32 %v331, %v331
    %v348 = vmul.f32 %v332, %v332
    %v349 = vmul.f32 %v333, %v333
    %v350 = vadd.f32 %v334, 1.0
    %v351 = vadd.f32 %v335, 1.0
    %v352 = vadd.f32 %v336, 1.0
    %v353 = vadd.f32 %v337, 1.0
    %v354 = vadd.f32 %v338, 1.0
    %v355 = vadd.f32 %v339, 1.0
    %v356 = vadd.f32 %v340, 1.0
    %v357 = vadd.f32 %v341, 1.0
    %v358 = vadd.f32 %v342, 1.0
    %v359 = vadd.f32 %v343, 1.0
    %v360 = vadd.f32 %v344, 1.0
    %v361 = vadd.f32 %v345, 1.0
    %v362 = vadd.f32 %v346, 1.0
    %v363 = vadd.f32 %v347, 1.0
    %v364 = vadd.f32 %v348, 1.0
    %v365 = vadd.f32 %v349, 1.0
    %v366 = vrsqrt.pop %v350
    %v367 = vmul.f32 %v366, %v350
    %v368 = vmul.f32 %v367, %v366
    %v369 = vmul.f32 0.5, %v368
    %v370 = vsub.f32 1.5, %v369
    %v371 = vmul.f32 %v366, %v370
    %v372 = vmul.f32 %v350, %v371
    %vm373 = vcmp.eq.f32.partialorder %v350, inf
    %v374 = vsel %vm373, %v350, %v372
    %vm375 = vcmp.eq.f32.partialorder %v350, 0.0
    %v376 = vand.u32 %v350, 2147483648
    %v377 = vsel %vm375, %v376, %v374
    %v378 = vrsqrt.pop %v351
    %v379 = vmul.f32 %v378, %v351
    %v380 = vmul.f32 %v379, %v378
    %v381 = vmul.f32 0.5, %v380
    %v382 = vsub.f32 1.5, %v381
    %v383 = vmul.f32 %v378, %v382
    %v384 = vmul.f32 %v351, %v383
    %vm385 = vcmp.eq.f32.partialorder %v351, inf
    %v386 = vsel %vm385, %v351, %v384
    %vm387 = vcmp.eq.f32.partialorder %v351, 0.0
    %v388 = vand.u32 %v351, 2147483648
    %v389 = vsel %vm387, %v388, %v386
    %v390 = vrsqrt.pop %v352
    %v391 = vmul.f32 %v390, %v352
    %v392 = vmul.f32 %v391, %v390
    %v393 = vmul.f32 0.5, %v392
    %v394 = vsub.f32 1.5, %v393
    %v395 = vmul.f32 %v390, %v394
    %v396 = vmul.f32 %v352, %v395
    %vm397 = vcmp.eq.f32.partialorder %v352, inf
    %v398 = vsel %vm397, %v352, %v396
    %vm399 = vcmp.eq.f32.partialorder %v352, 0.0
    %v400 = vand.u32 %v352, 2147483648
    %v401 = vsel %vm399, %v400, %v398
    %v402 = vrsqrt.pop %v353
    %v403 = vmul.f32 %v402, %v353
    %v404 = vmul.f32 %v403, %v402
    %v405 = vmul.f32 0.5, %v404
    %v406 = vsub.f32 1.5, %v405
    %v407 = vmul.f32 %v402, %v406
    %v408 = vmul.f32 %v353, %v407
    %vm409 = vcmp.eq.f32.partialorder %v353, inf
    %v410 = vsel %vm409, %v353, %v408
    %vm411 = vcmp.eq.f32.partialorder %v353, 0.0
    %v412 = vand.u32 %v353, 2147483648
    %v413 = vsel %vm411, %v412, %v410
    %v414 = vrsqrt.pop %v354
    %v415 = vmul.f32 %v414, %v354
    %v416 = vmul.f32 %v415, %v414
    %v417 = vmul.f32 0.5, %v416
    %v418 = vsub.f32 1.5, %v417
    %v419 = vmul.f32 %v414, %v418
    %v420 = vmul.f32 %v354, %v419
    %vm421 = vcmp.eq.f32.partialorder %v354, inf
    %v422 = vsel %vm421, %v354, %v420
    %vm423 = vcmp.eq.f32.partialorder %v354, 0.0
    %v424 = vand.u32 %v354, 2147483648
    %v425 = vsel %vm423, %v424, %v422
    %v426 = vrsqrt.pop %v355
    %v427 = vmul.f32 %v426, %v355
    %v428 = vmul.f32 %v427, %v426
    %v429 = vmul.f32 0.5, %v428
    %v430 = vsub.f32 1.5, %v429
    %v431 = vmul.f32 %v426, %v430
    %v432 = vmul.f32 %v355, %v431
    %vm433 = vcmp.eq.f32.partialorder %v355, inf
    %v434 = vsel %vm433, %v355, %v432
    %vm435 = vcmp.eq.f32.partialorder %v355, 0.0
    %v436 = vand.u32 %v355, 2147483648
    %v437 = vsel %vm435, %v436, %v434
    %v438 = vrsqrt.pop %v356
    %v439 = vmul.f32 %v438, %v356
    %v440 = vmul.f32 %v439, %v438
    %v441 = vmul.f32 0.5, %v440
    %v442 = vsub.f32 1.5, %v441
    %v443 = vmul.f32 %v438, %v442
    %v444 = vmul.f32 %v356, %v443
    %vm445 = vcmp.eq.f32.partialorder %v356, inf
    %v446 = vsel %vm445, %v356, %v444
    %vm447 = vcmp.eq.f32.partialorder %v356, 0.0
    %v448 = vand.u32 %v356, 2147483648
    %v449 = vsel %vm447, %v448, %v446
    %v450 = vrsqrt.pop %v357
    %v451 = vmul.f32 %v450, %v357
    %v452 = vmul.f32 %v451, %v450
    %v453 = vmul.f32 0.5, %v452
    %v454 = vsub.f32 1.5, %v453
    %v455 = vmul.f32 %v450, %v454
    %v456 = vmul.f32 %v357, %v455
    %vm457 = vcmp.eq.f32.partialorder %v357, inf
    %v458 = vsel %vm457, %v357, %v456
    %vm459 = vcmp.eq.f32.partialorder %v357, 0.0
    %v460 = vand.u32 %v357, 2147483648
    %v461 = vsel %vm459, %v460, %v458
    %v462 = vrsqrt.pop %v358
    %v463 = vmul.f32 %v462, %v358
    %v464 = vmul.f32 %v463, %v462
    %v465 = vmul.f32 0.5, %v464
    %v466 = vsub.f32 1.5, %v465
    %v467 = vmul.f32 %v462, %v466
    %v468 = vmul.f32 %v358, %v467
    %vm469 = vcmp.eq.f32.partialorder %v358, inf
    %v470 = vsel %vm469, %v358, %v468
    %vm471 = vcmp.eq.f32.partialorder %v358, 0.0
    %v472 = vand.u32 %v358, 2147483648
    %v473 = vsel %vm471, %v472, %v470
    %v474 = vrsqrt.pop %v359
    %v475 = vmul.f32 %v474, %v359
    %v476 = vmul.f32 %v475, %v474
    %v477 = vmul.f32 0.5, %v476
    %v478 = vsub.f32 1.5, %v477
    %v479 = vmul.f32 %v474, %v478
    %v480 = vmul.f32 %v359, %v479
    %vm481 = vcmp.eq.f32.partialorder %v359, inf
    %v482 = vsel %vm481, %v359, %v480
    %vm483 = vcmp.eq.f32.partialorder %v359, 0.0
    %v484 = vand.u32 %v359, 2147483648
    %v485 = vsel %vm483, %v484, %v482
    %v486 = vrsqrt.pop %v360
    %v487 = vmul.f32 %v486, %v360
    %v488 = vmul.f32 %v487, %v486
    %v489 = vmul.f32 0.5, %v488
    %v490 = vsub.f32 1.5, %v489
    %v491 = vmul.f32 %v486, %v490
    %v492 = vmul.f32 %v360, %v491
    %vm493 = vcmp.eq.f32.partialorder %v360, inf
    %v494 = vsel %vm493, %v360, %v492
    %vm495 = vcmp.eq.f32.partialorder %v360, 0.0
    %v496 = vand.u32 %v360, 2147483648
    %v497 = vsel %vm495, %v496, %v494
    %v498 = vrsqrt.pop %v361
    %v499 = vmul.f32 %v498, %v361
    %v500 = vmul.f32 %v499, %v498
    %v501 = vmul.f32 0.5, %v500
    %v502 = vsub.f32 1.5, %v501
    %v503 = vmul.f32 %v498, %v502
    %v504 = vmul.f32 %v361, %v503
    %vm505 = vcmp.eq.f32.partialorder %v361, inf
    %v506 = vsel %vm505, %v361, %v504
    %vm507 = vcmp.eq.f32.partialorder %v361, 0.0
    %v508 = vand.u32 %v361, 2147483648
    %v509 = vsel %vm507, %v508, %v506
    %v510 = vrsqrt.pop %v362
    %v511 = vmul.f32 %v510, %v362
    %v512 = vmul.f32 %v511, %v510
    %v513 = vmul.f32 0.5, %v512
    %v514 = vsub.f32 1.5, %v513
    %v515 = vmul.f32 %v510, %v514
    %v516 = vmul.f32 %v362, %v515
    %vm517 = vcmp.eq.f32.partialorder %v362, inf
    %v518 = vsel %vm517, %v362, %v516
    %vm519 = vcmp.eq.f32.partialorder %v362, 0.0
    %v520 = vand.u32 %v362, 2147483648
    %v521 = vsel %vm519, %v520, %v518
    %v522 = vrsqrt.pop %v363
    %v523 = vmul.f32 %v522, %v363
    %v524 = vmul.f32 %v523, %v522
    %v525 = vmul.f32 0.5, %v524
    %v526 = vsub.f32 1.5, %v525
    %v527 = vmul.f32 %v522, %v526
    %v528 = vmul.f32 %v363, %v527
    %vm529 = vcmp.eq.f32.partialorder %v363, inf
    %v530 = vsel %vm529, %v363, %v528
    %vm531 = vcmp.eq.f32.partialorder %v363, 0.0
    %v532 = vand.u32 %v363, 2147483648
    %v533 = vsel %vm531, %v532, %v530
    %v534 = vrsqrt.pop %v364
    %v535 = vmul.f32 %v534, %v364
    %v536 = vmul.f32 %v535, %v534
    %v537 = vmul.f32 0.5, %v536
    %v538 = vsub.f32 1.5, %v537
    %v539 = vmul.f32 %v534, %v538
    %v540 = vmul.f32 %v364, %v539
    %vm541 = vcmp.eq.f32.partialorder %v364, inf
    %v542 = vsel %vm541, %v364, %v540
    %vm543 = vcmp.eq.f32.partialorder %v364, 0.0
    %v544 = vand.u32 %v364, 2147483648
    %v545 = vsel %vm543, %v544, %v542
    %v546 = vrsqrt.pop %v365
    %v547 = vmul.f32 %v546, %v365
    %v548 = vmul.f32 %v547, %v546
    %v549 = vmul.f32 0.5, %v548
    %v550 = vsub.f32 1.5, %v549
    %v551 = vmul.f32 %v546, %v550
    %v552 = vmul.f32 %v365, %v551
    %vm553 = vcmp.eq.f32.partialorder %v365, inf
    %v554 = vsel %vm553, %v365, %v552
    %vm555 = vcmp.eq.f32.partialorder %v365, 0.0
    %v556 = vand.u32 %v365, 2147483648
    %v557 = vsel %vm555, %v556, %v554
    %v558 = vadd.f32 %v318, %v377
    %v559 = vadd.f32 %v319, %v389
    %v560 = vadd.f32 %v320, %v401
    %v561 = vadd.f32 %v321, %v413
    %v562 = vadd.f32 %v322, %v425
    %v563 = vadd.f32 %v323, %v437
    %v564 = vadd.f32 %v324, %v449
    %v565 = vadd.f32 %v325, %v461
    %v566 = vadd.f32 %v326, %v473
    %v567 = vadd.f32 %v327, %v485
    %v568 = vadd.f32 %v328, %v497
    %v569 = vadd.f32 %v329, %v509
    %v570 = vadd.f32 %v330, %v521
    %v571 = vadd.f32 %v331, %v533
    %v572 = vadd.f32 %v332, %v545
    %v573 = vadd.f32 %v333, %v557
    %v574 = vlog2.pop %v558
    %v575 = vmul.f32 %v574, 0.6931472
    %v576 = vlog2.pop %v559
    %v577 = vmul.f32 %v576, 0.6931472
    %v578 = vlog2.pop %v560
    %v579 = vmul.f32 %v578, 0.6931472
    %v580 = vlog2.pop %v561
    %v581 = vmul.f32 %v580, 0.6931472
    %v582 = vlog2.pop %v562
    %v583 = vmul.f32 %v582, 0.6931472
    %v584 = vlog2.pop %v563
    %v585 = vmul.f32 %v584, 0.6931472
    %v586 = vlog2.pop %v564
    %v587 = vmul.f32 %v586, 0.6931472
    %v588 = vlog2.pop %v565
    %v589 = vmul.f32 %v588, 0.6931472
    %v590 = vlog2.pop %v566
    %v591 = vmul.f32 %v590, 0.6931472
    %v592 = vlog2.pop %v567
    %v593 = vmul.f32 %v592, 0.6931472
    %v594 = vlog2.pop %v568
    %v595 = vmul.f32 %v594, 0.6931472
    %v596 = vlog2.pop %v569
    %v597 = vmul.f32 %v596, 0.6931472
    %v598 = vlog2.pop %v570
    %v599 = vmul.f32 %v598, 0.6931472
    %v600 = vlog2.pop %v571
    %v601 = vmul.f32 %v600, 0.6931472
    %v602 = vlog2.pop %v572
    %v603 = vmul.f32 %v602, 0.6931472
    %v604 = vlog2.pop %v573
    %v605 = vmul.f32 %v604, 0.6931472
    %v607 = vperm.slane %v39, 0
    %v609 = vmul.f32 %v607, %v575
    %v610 = vmul.f32 %v607, %v577
    %v611 = vmul.f32 %v607, %v579
    %v612 = vmul.f32 %v607, %v581
    %v613 = vmul.f32 %v607, %v583
    %v614 = vmul.f32 %v607, %v585
    %v615 = vmul.f32 %v607, %v587
    %v616 = vmul.f32 %v607, %v589
    %v617 = vmul.f32 %v607, %v591
    %v618 = vmul.f32 %v607, %v593
    %v619 = vmul.f32 %v607, %v595
    %v620 = vmul.f32 %v607, %v597
    %v621 = vmul.f32 %v607, %v599
    %v622 = vmul.f32 %v607, %v601
    %v623 = vmul.f32 %v607, %v603
    %v624 = vmul.f32 %v607, %v605
    %v625 = vmul.f32 %v609, 1.442695
    %v626 = vpow.pop %v625
    %v627 = vmul.f32 %v610, 1.442695
    %v628 = vpow.pop %v627
    %v629 = vmul.f32 %v611, 1.442695
    %v630 = vpow.pop %v629
    %v631 = vmul.f32 %v612, 1.442695
    %v632 = vpow.pop %v631
    %v633 = vmul.f32 %v613, 1.442695
    %v634 = vpow.pop %v633
    %v635 = vmul.f32 %v614, 1.442695
    %v636 = vpow.pop %v635
    %v637 = vmul.f32 %v615, 1.442695
    %v638 = vpow.pop %v637
    %v639 = vmul.f32 %v616, 1.442695
    %v640 = vpow.pop %v639
    %v641 = vmul.f32 %v617, 1.442695
    %v642 = vpow.pop %v641
    %v643 = vmul.f32 %v618, 1.442695
    %v644 = vpow.pop %v643
    %v645 = vmul.f32 %v619, 1.442695
    %v646 = vpow.pop %v645
    %v647 = vmul.f32 %v620, 1.442695
    %v648 = vpow.pop %v647
    %v649 = vmul.f32 %v621, 1.442695
    %v650 = vpow.pop %v649
    %v651 = vmul.f32 %v622, 1.442695
    %v652 = vpow.pop %v651
    %v653 = vmul.f32 %v623, 1.442695
    %v654 = vpow.pop %v653
    %v655 = vmul.f32 %v624, 1.442695
    %v656 = vpow.pop %v655
    %v657 = vrcp.pop %v626
    %v658 = vrcp.pop %v628
    %v659 = vrcp.pop %v630
    %v660 = vrcp.pop %v632
    %v661 = vrcp.pop %v634
    %v662 = vrcp.pop %v636
    %v663 = vrcp.pop %v638
    %v664 = vrcp.pop %v640
    %v665 = vrcp.pop %v642
    %v666 = vrcp.pop %v644
    %v667 = vrcp.pop %v646
    %v668 = vrcp.pop %v648
    %v669 = vrcp.pop %v650
    %v670 = vrcp.pop %v652
    %v671 = vrcp.pop %v654
    %v672 = vrcp.pop %v656
    %v673 = vsub.f32 %v626, %v657
    %v674 = vsub.f32 %v628, %v658
    %v675 = vsub.f32 %v630, %v659
    %v676 = vsub.f32 %v632, %v660
    %v677 = vsub.f32 %v634, %v661
    %v678 = vsub.f32 %v636, %v662
    %v679 = vsub.f32 %v638, %v663
    %v680 = vsub.f32 %v640, %v664
    %v681 = vsub.f32 %v642, %v665
    %v682 = vsub.f32 %v644, %v666
    %v683 = vsub.f32 %v646, %v667
    %v684 = vsub.f32 %v648, %v668
    %v685 = vsub.f32 %v650, %v669
    %v686 = vsub.f32 %v652, %v670
    %v687 = vsub.f32 %v654, %v671
    %v688 = vsub.f32 %v656, %v672
    %v690 = vperm.slane %v40, 0
    %v692 = vmul.f32 %v673, %v690
    %v693 = vmul.f32 %v674, %v690
    %v694 = vmul.f32 %v675, %v690
    %v695 = vmul.f32 %v676, %v690
    %v696 = vmul.f32 %v677, %v690
    %v697 = vmul.f32 %v678, %v690
    %v698 = vmul.f32 %v679, %v690
    %v699 = vmul.f32 %v680, %v690
    %v700 = vmul.f32 %v681, %v690
    %v701 = vmul.f32 %v682, %v690
    %v702 = vmul.f32 %v683, %v690
    %v703 = vmul.f32 %v684, %v690
    %v704 = vmul.f32 %v685, %v690
    %v705 = vmul.f32 %v686, %v690
    %v706 = vmul.f32 %v687, %v690
    %v707 = vmul.f32 %v688, %v690
    %vm708 = vcmp.ge.f32.partialorder %v302, 0.0
    %vm709 = vcmp.ge.f32.partialorder %v303, 0.0
    %vm710 = vcmp.ge.f32.partialorder %v304, 0.0
    %vm711 = vcmp.ge.f32.partialorder %v305, 0.0
    %vm712 = vcmp.ge.f32.partialorder %v306, 0.0
    %vm713 = vcmp.ge.f32.partialorder %v307, 0.0
    %vm714 = vcmp.ge.f32.partialorder %v308, 0.0
    %vm715 = vcmp.ge.f32.partialorder %v309, 0.0
    %vm716 = vcmp.ge.f32.partialorder %v310, 0.0
    %vm717 = vcmp.ge.f32.partialorder %v311, 0.0
    %vm718 = vcmp.ge.f32.partialorder %v312, 0.0
    %vm719 = vcmp.ge.f32.partialorder %v313, 0.0
    %vm720 = vcmp.ge.f32.partialorder %v314, 0.0
    %vm721 = vcmp.ge.f32.partialorder %v315, 0.0
    %vm722 = vcmp.ge.f32.partialorder %v316, 0.0
    %vm723 = vcmp.ge.f32.partialorder %v317, 0.0
    %v724 = vsub.f32 0.0, %v692
    %v725 = vsub.f32 0.0, %v693
    %v726 = vsub.f32 0.0, %v694
    %v727 = vsub.f32 0.0, %v695
    %v728 = vsub.f32 0.0, %v696
    %v729 = vsub.f32 0.0, %v697
    %v730 = vsub.f32 0.0, %v698
    %v731 = vsub.f32 0.0, %v699
    %v732 = vsub.f32 0.0, %v700
    %v733 = vsub.f32 0.0, %v701
    %v734 = vsub.f32 0.0, %v702
    %v735 = vsub.f32 0.0, %v703
    %v736 = vsub.f32 0.0, %v704
    %v737 = vsub.f32 0.0, %v705
    %v738 = vsub.f32 0.0, %v706
    %v739 = vsub.f32 0.0, %v707
    %v740 = vsel %vm708, %v692, %v724
    %v741 = vsel %vm709, %v693, %v725
    %v742 = vsel %vm710, %v694, %v726
    %v743 = vsel %vm711, %v695, %v727
    %v744 = vsel %vm712, %v696, %v728
    %v745 = vsel %vm713, %v697, %v729
    %v746 = vsel %vm714, %v698, %v730
    %v747 = vsel %vm715, %v699, %v731
    %v748 = vsel %vm716, %v700, %v732
    %v749 = vsel %vm717, %v701, %v733
    %v750 = vsel %vm718, %v702, %v734
    %v751 = vsel %vm719, %v703, %v735
    %v752 = vsel %vm720, %v704, %v736
    %v753 = vsel %vm721, %v705, %v737
    %v754 = vsel %vm722, %v706, %v738
    %v755 = vsel %vm723, %v707, %v739
    %v756 = vmul.f32 %v740, %v740
    %v757 = vmul.f32 %v741, %v741
    %v758 = vmul.f32 %v742, %v742
    %v759 = vmul.f32 %v743, %v743
    %v760 = vmul.f32 %v744, %v744
    %v761 = vmul.f32 %v745, %v745
    %v762 = vmul.f32 %v746, %v746
    %v763 = vmul.f32 %v747, %v747
    %v764 = vmul.f32 %v748, %v748
    %v765 = vmul.f32 %v749, %v749
    %v766 = vmul.f32 %v750, %v750
    %v767 = vmul.f32 %v751, %v751
    %v768 = vmul.f32 %v752, %v752
    %v769 = vmul.f32 %v753, %v753
    %v770 = vmul.f32 %v754, %v754
    %v771 = vmul.f32 %v755, %v755
    %772 = vadd.xlane.f32.xlu0 %v756
    %v773 = vpop.xlane.xlu0 %772
    %774 = vadd.xlane.f32.xlu0 %v757
    %v775 = vpop.xlane.xlu0 %774
    %776 = vadd.xlane.f32.xlu0 %v758
    %v777 = vpop.xlane.xlu0 %776
    %778 = vadd.xlane.f32.xlu0 %v759
    %v779 = vpop.xlane.xlu0 %778
    %780 = vadd.xlane.f32.xlu0 %v760
    %v781 = vpop.xlane.xlu0 %780
    %782 = vadd.xlane.f32.xlu0 %v761
    %v783 = vpop.xlane.xlu0 %782
    %784 = vadd.xlane.f32.xlu0 %v762
    %v785 = vpop.xlane.xlu0 %784
    %786 = vadd.xlane.f32.xlu0 %v763
    %v787 = vpop.xlane.xlu0 %786
    %788 = vadd.xlane.f32.xlu0 %v764
    %v789 = vpop.xlane.xlu0 %788
    %790 = vadd.xlane.f32.xlu0 %v765
    %v791 = vpop.xlane.xlu0 %790
    %792 = vadd.xlane.f32.xlu0 %v766
    %v793 = vpop.xlane.xlu0 %792
    %794 = vadd.xlane.f32.xlu0 %v767
    %v795 = vpop.xlane.xlu0 %794
    %796 = vadd.xlane.f32.xlu0 %v768
    %v797 = vpop.xlane.xlu0 %796
    %798 = vadd.xlane.f32.xlu0 %v769
    %v799 = vpop.xlane.xlu0 %798
    %800 = vadd.xlane.f32.xlu0 %v770
    %v801 = vpop.xlane.xlu0 %800
    %802 = vadd.xlane.f32.xlu0 %v771
    %v803 = vpop.xlane.xlu0 %802
    %v804 = vadd.f32 %v773, 1.0
    %v805 = vadd.f32 %v775, 1.0
    %v806 = vadd.f32 %v777, 1.0
    %v807 = vadd.f32 %v779, 1.0
    %v808 = vadd.f32 %v781, 1.0
    %v809 = vadd.f32 %v783, 1.0
    %v810 = vadd.f32 %v785, 1.0
    %v811 = vadd.f32 %v787, 1.0
    %v812 = vadd.f32 %v789, 1.0
    %v813 = vadd.f32 %v791, 1.0
    %v814 = vadd.f32 %v793, 1.0
    %v815 = vadd.f32 %v795, 1.0
    %v816 = vadd.f32 %v797, 1.0
    %v817 = vadd.f32 %v799, 1.0
    %v818 = vadd.f32 %v801, 1.0
    %v819 = vadd.f32 %v803, 1.0
    %v820 = vrsqrt.pop %v804
    %v821 = vmul.f32 %v820, %v804
    %v822 = vmul.f32 %v821, %v820
    %v823 = vmul.f32 0.5, %v822
    %v824 = vsub.f32 1.5, %v823
    %v825 = vmul.f32 %v820, %v824
    %v826 = vmul.f32 %v804, %v825
    %vm827 = vcmp.eq.f32.partialorder %v804, inf
    %v828 = vsel %vm827, %v804, %v826
    %vm829 = vcmp.eq.f32.partialorder %v804, 0.0
    %v830 = vand.u32 %v804, 2147483648
    %v831 = vsel %vm829, %v830, %v828
    %v832 = vrsqrt.pop %v805
    %v833 = vmul.f32 %v832, %v805
    %v834 = vmul.f32 %v833, %v832
    %v835 = vmul.f32 0.5, %v834
    %v836 = vsub.f32 1.5, %v835
    %v837 = vmul.f32 %v832, %v836
    %v838 = vmul.f32 %v805, %v837
    %vm839 = vcmp.eq.f32.partialorder %v805, inf
    %v840 = vsel %vm839, %v805, %v838
    %vm841 = vcmp.eq.f32.partialorder %v805, 0.0
    %v842 = vand.u32 %v805, 2147483648
    %v843 = vsel %vm841, %v842, %v840
    %v844 = vrsqrt.pop %v806
    %v845 = vmul.f32 %v844, %v806
    %v846 = vmul.f32 %v845, %v844
    %v847 = vmul.f32 0.5, %v846
    %v848 = vsub.f32 1.5, %v847
    %v849 = vmul.f32 %v844, %v848
    %v850 = vmul.f32 %v806, %v849
    %vm851 = vcmp.eq.f32.partialorder %v806, inf
    %v852 = vsel %vm851, %v806, %v850
    %vm853 = vcmp.eq.f32.partialorder %v806, 0.0
    %v854 = vand.u32 %v806, 2147483648
    %v855 = vsel %vm853, %v854, %v852
    %v856 = vrsqrt.pop %v807
    %v857 = vmul.f32 %v856, %v807
    %v858 = vmul.f32 %v857, %v856
    %v859 = vmul.f32 0.5, %v858
    %v860 = vsub.f32 1.5, %v859
    %v861 = vmul.f32 %v856, %v860
    %v862 = vmul.f32 %v807, %v861
    %vm863 = vcmp.eq.f32.partialorder %v807, inf
    %v864 = vsel %vm863, %v807, %v862
    %vm865 = vcmp.eq.f32.partialorder %v807, 0.0
    %v866 = vand.u32 %v807, 2147483648
    %v867 = vsel %vm865, %v866, %v864
    %v868 = vrsqrt.pop %v808
    %v869 = vmul.f32 %v868, %v808
    %v870 = vmul.f32 %v869, %v868
    %v871 = vmul.f32 0.5, %v870
    %v872 = vsub.f32 1.5, %v871
    %v873 = vmul.f32 %v868, %v872
    %v874 = vmul.f32 %v808, %v873
    %vm875 = vcmp.eq.f32.partialorder %v808, inf
    %v876 = vsel %vm875, %v808, %v874
    %vm877 = vcmp.eq.f32.partialorder %v808, 0.0
    %v878 = vand.u32 %v808, 2147483648
    %v879 = vsel %vm877, %v878, %v876
    %v880 = vrsqrt.pop %v809
    %v881 = vmul.f32 %v880, %v809
    %v882 = vmul.f32 %v881, %v880
    %v883 = vmul.f32 0.5, %v882
    %v884 = vsub.f32 1.5, %v883
    %v885 = vmul.f32 %v880, %v884
    %v886 = vmul.f32 %v809, %v885
    %vm887 = vcmp.eq.f32.partialorder %v809, inf
    %v888 = vsel %vm887, %v809, %v886
    %vm889 = vcmp.eq.f32.partialorder %v809, 0.0
    %v890 = vand.u32 %v809, 2147483648
    %v891 = vsel %vm889, %v890, %v888
    %v892 = vrsqrt.pop %v810
    %v893 = vmul.f32 %v892, %v810
    %v894 = vmul.f32 %v893, %v892
    %v895 = vmul.f32 0.5, %v894
    %v896 = vsub.f32 1.5, %v895
    %v897 = vmul.f32 %v892, %v896
    %v898 = vmul.f32 %v810, %v897
    %vm899 = vcmp.eq.f32.partialorder %v810, inf
    %v900 = vsel %vm899, %v810, %v898
    %vm901 = vcmp.eq.f32.partialorder %v810, 0.0
    %v902 = vand.u32 %v810, 2147483648
    %v903 = vsel %vm901, %v902, %v900
    %v904 = vrsqrt.pop %v811
    %v905 = vmul.f32 %v904, %v811
    %v906 = vmul.f32 %v905, %v904
    %v907 = vmul.f32 0.5, %v906
    %v908 = vsub.f32 1.5, %v907
    %v909 = vmul.f32 %v904, %v908
    %v910 = vmul.f32 %v811, %v909
    %vm911 = vcmp.eq.f32.partialorder %v811, inf
    %v912 = vsel %vm911, %v811, %v910
    %vm913 = vcmp.eq.f32.partialorder %v811, 0.0
    %v914 = vand.u32 %v811, 2147483648
    %v915 = vsel %vm913, %v914, %v912
    %v916 = vrsqrt.pop %v812
    %v917 = vmul.f32 %v916, %v812
    %v918 = vmul.f32 %v917, %v916
    %v919 = vmul.f32 0.5, %v918
    %v920 = vsub.f32 1.5, %v919
    %v921 = vmul.f32 %v916, %v920
    %v922 = vmul.f32 %v812, %v921
    %vm923 = vcmp.eq.f32.partialorder %v812, inf
    %v924 = vsel %vm923, %v812, %v922
    %vm925 = vcmp.eq.f32.partialorder %v812, 0.0
    %v926 = vand.u32 %v812, 2147483648
    %v927 = vsel %vm925, %v926, %v924
    %v928 = vrsqrt.pop %v813
    %v929 = vmul.f32 %v928, %v813
    %v930 = vmul.f32 %v929, %v928
    %v931 = vmul.f32 0.5, %v930
    %v932 = vsub.f32 1.5, %v931
    %v933 = vmul.f32 %v928, %v932
    %v934 = vmul.f32 %v813, %v933
    %vm935 = vcmp.eq.f32.partialorder %v813, inf
    %v936 = vsel %vm935, %v813, %v934
    %vm937 = vcmp.eq.f32.partialorder %v813, 0.0
    %v938 = vand.u32 %v813, 2147483648
    %v939 = vsel %vm937, %v938, %v936
    %v940 = vrsqrt.pop %v814
    %v941 = vmul.f32 %v940, %v814
    %v942 = vmul.f32 %v941, %v940
    %v943 = vmul.f32 0.5, %v942
    %v944 = vsub.f32 1.5, %v943
    %v945 = vmul.f32 %v940, %v944
    %v946 = vmul.f32 %v814, %v945
    %vm947 = vcmp.eq.f32.partialorder %v814, inf
    %v948 = vsel %vm947, %v814, %v946
    %vm949 = vcmp.eq.f32.partialorder %v814, 0.0
    %v950 = vand.u32 %v814, 2147483648
    %v951 = vsel %vm949, %v950, %v948
    %v952 = vrsqrt.pop %v815
    %v953 = vmul.f32 %v952, %v815
    %v954 = vmul.f32 %v953, %v952
    %v955 = vmul.f32 0.5, %v954
    %v956 = vsub.f32 1.5, %v955
    %v957 = vmul.f32 %v952, %v956
    %v958 = vmul.f32 %v815, %v957
    %vm959 = vcmp.eq.f32.partialorder %v815, inf
    %v960 = vsel %vm959, %v815, %v958
    %vm961 = vcmp.eq.f32.partialorder %v815, 0.0
    %v962 = vand.u32 %v815, 2147483648
    %v963 = vsel %vm961, %v962, %v960
    %v964 = vrsqrt.pop %v816
    %v965 = vmul.f32 %v964, %v816
    %v966 = vmul.f32 %v965, %v964
    %v967 = vmul.f32 0.5, %v966
    %v968 = vsub.f32 1.5, %v967
    %v969 = vmul.f32 %v964, %v968
    %v970 = vmul.f32 %v816, %v969
    %vm971 = vcmp.eq.f32.partialorder %v816, inf
    %v972 = vsel %vm971, %v816, %v970
    %vm973 = vcmp.eq.f32.partialorder %v816, 0.0
    %v974 = vand.u32 %v816, 2147483648
    %v975 = vsel %vm973, %v974, %v972
    %v976 = vrsqrt.pop %v817
    %v977 = vmul.f32 %v976, %v817
    %v978 = vmul.f32 %v977, %v976
    %v979 = vmul.f32 0.5, %v978
    %v980 = vsub.f32 1.5, %v979
    %v981 = vmul.f32 %v976, %v980
    %v982 = vmul.f32 %v817, %v981
    %vm983 = vcmp.eq.f32.partialorder %v817, inf
    %v984 = vsel %vm983, %v817, %v982
    %vm985 = vcmp.eq.f32.partialorder %v817, 0.0
    %v986 = vand.u32 %v817, 2147483648
    %v987 = vsel %vm985, %v986, %v984
    %v988 = vrsqrt.pop %v818
    %v989 = vmul.f32 %v988, %v818
    %v990 = vmul.f32 %v989, %v988
    %v991 = vmul.f32 0.5, %v990
    %v992 = vsub.f32 1.5, %v991
    %v993 = vmul.f32 %v988, %v992
    %v994 = vmul.f32 %v818, %v993
    %vm995 = vcmp.eq.f32.partialorder %v818, inf
    %v996 = vsel %vm995, %v818, %v994
    %vm997 = vcmp.eq.f32.partialorder %v818, 0.0
    %v998 = vand.u32 %v818, 2147483648
    %v999 = vsel %vm997, %v998, %v996
    %v1000 = vrsqrt.pop %v819
    %v1001 = vmul.f32 %v1000, %v819
    %v1002 = vmul.f32 %v1001, %v1000
    %v1003 = vmul.f32 0.5, %v1002
    %v1004 = vsub.f32 1.5, %v1003
    %v1005 = vmul.f32 %v1000, %v1004
    %v1006 = vmul.f32 %v819, %v1005
    %vm1007 = vcmp.eq.f32.partialorder %v819, inf
    %v1008 = vsel %vm1007, %v819, %v1006
    %vm1009 = vcmp.eq.f32.partialorder %v819, 0.0
    %v1010 = vand.u32 %v819, 2147483648
    %v1011 = vsel %vm1009, %v1010, %v1008
    %v1012 = vadd.f32 %v831, 1.0
    %v1013 = vadd.f32 %v843, 1.0
    %v1014 = vadd.f32 %v855, 1.0
    %v1015 = vadd.f32 %v867, 1.0
    %v1016 = vadd.f32 %v879, 1.0
    %v1017 = vadd.f32 %v891, 1.0
    %v1018 = vadd.f32 %v903, 1.0
    %v1019 = vadd.f32 %v915, 1.0
    %v1020 = vadd.f32 %v927, 1.0
    %v1021 = vadd.f32 %v939, 1.0
    %v1022 = vadd.f32 %v951, 1.0
    %v1023 = vadd.f32 %v963, 1.0
    %v1024 = vadd.f32 %v975, 1.0
    %v1025 = vadd.f32 %v987, 1.0
    %v1026 = vadd.f32 %v999, 1.0
    %v1027 = vadd.f32 %v1011, 1.0
    %v1028 = vrcp.pop %v1012
    %v1029 = vrcp.pop %v1013
    %v1030 = vrcp.pop %v1014
    %v1031 = vrcp.pop %v1015
    %v1032 = vrcp.pop %v1016
    %v1033 = vrcp.pop %v1017
    %v1034 = vrcp.pop %v1018
    %v1035 = vrcp.pop %v1019
    %v1036 = vrcp.pop %v1020
    %v1037 = vrcp.pop %v1021
    %v1038 = vrcp.pop %v1022
    %v1039 = vrcp.pop %v1023
    %v1040 = vrcp.pop %v1024
    %v1041 = vrcp.pop %v1025
    %v1042 = vrcp.pop %v1026
    %v1043 = vrcp.pop %v1027
    %v1044 = vmul.f32 %v1012, 0.996
    %v1045 = vmul.f32 %v1013, 0.996
    %v1046 = vmul.f32 %v1014, 0.996
    %v1047 = vmul.f32 %v1015, 0.996
    %v1048 = vmul.f32 %v1016, 0.996
    %v1049 = vmul.f32 %v1017, 0.996
    %v1050 = vmul.f32 %v1018, 0.996
    %v1051 = vmul.f32 %v1019, 0.996
    %v1052 = vmul.f32 %v1020, 0.996
    %v1053 = vmul.f32 %v1021, 0.996
    %v1054 = vmul.f32 %v1022, 0.996
    %v1055 = vmul.f32 %v1023, 0.996
    %v1056 = vmul.f32 %v1024, 0.996
    %v1057 = vmul.f32 %v1025, 0.996
    %v1058 = vmul.f32 %v1026, 0.996
    %v1059 = vmul.f32 %v1027, 0.996
    %v1060 = vmul.f32 %v1044, %v1044
    %v1061 = vmul.f32 %v1045, %v1045
    %v1062 = vmul.f32 %v1046, %v1046
    %v1063 = vmul.f32 %v1047, %v1047
    %v1064 = vmul.f32 %v1048, %v1048
    %v1065 = vmul.f32 %v1049, %v1049
    %v1066 = vmul.f32 %v1050, %v1050
    %v1067 = vmul.f32 %v1051, %v1051
    %v1068 = vmul.f32 %v1052, %v1052
    %v1069 = vmul.f32 %v1053, %v1053
    %v1070 = vmul.f32 %v1054, %v1054
    %v1071 = vmul.f32 %v1055, %v1055
    %v1072 = vmul.f32 %v1056, %v1056
    %v1073 = vmul.f32 %v1057, %v1057
    %v1074 = vmul.f32 %v1058, %v1058
    %v1075 = vmul.f32 %v1059, %v1059
    %vm1076 = vcmp.gt.f32.partialorder %v773, %v1060
    %vm1077 = vcmp.gt.f32.partialorder %v775, %v1061
    %vm1078 = vcmp.gt.f32.partialorder %v777, %v1062
    %vm1079 = vcmp.gt.f32.partialorder %v779, %v1063
    %vm1080 = vcmp.gt.f32.partialorder %v781, %v1064
    %vm1081 = vcmp.gt.f32.partialorder %v783, %v1065
    %vm1082 = vcmp.gt.f32.partialorder %v785, %v1066
    %vm1083 = vcmp.gt.f32.partialorder %v787, %v1067
    %vm1084 = vcmp.gt.f32.partialorder %v789, %v1068
    %vm1085 = vcmp.gt.f32.partialorder %v791, %v1069
    %vm1086 = vcmp.gt.f32.partialorder %v793, %v1070
    %vm1087 = vcmp.gt.f32.partialorder %v795, %v1071
    %vm1088 = vcmp.gt.f32.partialorder %v797, %v1072
    %vm1089 = vcmp.gt.f32.partialorder %v799, %v1073
    %vm1090 = vcmp.gt.f32.partialorder %v801, %v1074
    %vm1091 = vcmp.gt.f32.partialorder %v803, %v1075
    %v1092 = vmax.f32 %v773, 1e-30
    %v1093 = vmax.f32 %v775, 1e-30
    %v1094 = vmax.f32 %v777, 1e-30
    %v1095 = vmax.f32 %v779, 1e-30
    %v1096 = vmax.f32 %v781, 1e-30
    %v1097 = vmax.f32 %v783, 1e-30
    %v1098 = vmax.f32 %v785, 1e-30
    %v1099 = vmax.f32 %v787, 1e-30
    %v1100 = vmax.f32 %v789, 1e-30
    %v1101 = vmax.f32 %v791, 1e-30
    %v1102 = vmax.f32 %v793, 1e-30
    %v1103 = vmax.f32 %v795, 1e-30
    %v1104 = vmax.f32 %v797, 1e-30
    %v1105 = vmax.f32 %v799, 1e-30
    %v1106 = vmax.f32 %v801, 1e-30
    %v1107 = vmax.f32 %v803, 1e-30
    %v1108 = vrsqrt.pop %v1092
    %v1109 = vmul.f32 %v1108, %v1092
    %v1110 = vmul.f32 %v1109, %v1108
    %v1111 = vmul.f32 0.5, %v1110
    %v1112 = vsub.f32 1.5, %v1111
    %v1113 = vmul.f32 %v1108, %v1112
    %vm1114 = vweird.f32 %v1092
    %vm1115 = vweird.f32 %v1108
    %vm1116 = vmor %vm1114, %vm1115
    %v1117 = vsel %vm1116, %v1108, %v1113
    %v1118 = vrsqrt.pop %v1093
    %v1119 = vmul.f32 %v1118, %v1093
    %v1120 = vmul.f32 %v1119, %v1118
    %v1121 = vmul.f32 0.5, %v1120
    %v1122 = vsub.f32 1.5, %v1121
    %v1123 = vmul.f32 %v1118, %v1122
    %vm1124 = vweird.f32 %v1093
    %vm1125 = vweird.f32 %v1118
    %vm1126 = vmor %vm1124, %vm1125
    %v1127 = vsel %vm1126, %v1118, %v1123
    %v1128 = vrsqrt.pop %v1094
    %v1129 = vmul.f32 %v1128, %v1094
    %v1130 = vmul.f32 %v1129, %v1128
    %v1131 = vmul.f32 0.5, %v1130
    %v1132 = vsub.f32 1.5, %v1131
    %v1133 = vmul.f32 %v1128, %v1132
    %vm1134 = vweird.f32 %v1094
    %vm1135 = vweird.f32 %v1128
    %vm1136 = vmor %vm1134, %vm1135
    %v1137 = vsel %vm1136, %v1128, %v1133
    %v1138 = vrsqrt.pop %v1095
    %v1139 = vmul.f32 %v1138, %v1095
    %v1140 = vmul.f32 %v1139, %v1138
    %v1141 = vmul.f32 0.5, %v1140
    %v1142 = vsub.f32 1.5, %v1141
    %v1143 = vmul.f32 %v1138, %v1142
    %vm1144 = vweird.f32 %v1095
    %vm1145 = vweird.f32 %v1138
    %vm1146 = vmor %vm1144, %vm1145
    %v1147 = vsel %vm1146, %v1138, %v1143
    %v1148 = vrsqrt.pop %v1096
    %v1149 = vmul.f32 %v1148, %v1096
    %v1150 = vmul.f32 %v1149, %v1148
    %v1151 = vmul.f32 0.5, %v1150
    %v1152 = vsub.f32 1.5, %v1151
    %v1153 = vmul.f32 %v1148, %v1152
    %vm1154 = vweird.f32 %v1096
    %vm1155 = vweird.f32 %v1148
    %vm1156 = vmor %vm1154, %vm1155
    %v1157 = vsel %vm1156, %v1148, %v1153
    %v1158 = vrsqrt.pop %v1097
    %v1159 = vmul.f32 %v1158, %v1097
    %v1160 = vmul.f32 %v1159, %v1158
    %v1161 = vmul.f32 0.5, %v1160
    %v1162 = vsub.f32 1.5, %v1161
    %v1163 = vmul.f32 %v1158, %v1162
    %vm1164 = vweird.f32 %v1097
    %vm1165 = vweird.f32 %v1158
    %vm1166 = vmor %vm1164, %vm1165
    %v1167 = vsel %vm1166, %v1158, %v1163
    %v1168 = vrsqrt.pop %v1098
    %v1169 = vmul.f32 %v1168, %v1098
    %v1170 = vmul.f32 %v1169, %v1168
    %v1171 = vmul.f32 0.5, %v1170
    %v1172 = vsub.f32 1.5, %v1171
    %v1173 = vmul.f32 %v1168, %v1172
    %vm1174 = vweird.f32 %v1098
    %vm1175 = vweird.f32 %v1168
    %vm1176 = vmor %vm1174, %vm1175
    %v1177 = vsel %vm1176, %v1168, %v1173
    %v1178 = vrsqrt.pop %v1099
    %v1179 = vmul.f32 %v1178, %v1099
    %v1180 = vmul.f32 %v1179, %v1178
    %v1181 = vmul.f32 0.5, %v1180
    %v1182 = vsub.f32 1.5, %v1181
    %v1183 = vmul.f32 %v1178, %v1182
    %vm1184 = vweird.f32 %v1099
    %vm1185 = vweird.f32 %v1178
    %vm1186 = vmor %vm1184, %vm1185
    %v1187 = vsel %vm1186, %v1178, %v1183
    %v1188 = vrsqrt.pop %v1100
    %v1189 = vmul.f32 %v1188, %v1100
    %v1190 = vmul.f32 %v1189, %v1188
    %v1191 = vmul.f32 0.5, %v1190
    %v1192 = vsub.f32 1.5, %v1191
    %v1193 = vmul.f32 %v1188, %v1192
    %vm1194 = vweird.f32 %v1100
    %vm1195 = vweird.f32 %v1188
    %vm1196 = vmor %vm1194, %vm1195
    %v1197 = vsel %vm1196, %v1188, %v1193
    %v1198 = vrsqrt.pop %v1101
    %v1199 = vmul.f32 %v1198, %v1101
    %v1200 = vmul.f32 %v1199, %v1198
    %v1201 = vmul.f32 0.5, %v1200
    %v1202 = vsub.f32 1.5, %v1201
    %v1203 = vmul.f32 %v1198, %v1202
    %vm1204 = vweird.f32 %v1101
    %vm1205 = vweird.f32 %v1198
    %vm1206 = vmor %vm1204, %vm1205
    %v1207 = vsel %vm1206, %v1198, %v1203
    %v1208 = vrsqrt.pop %v1102
    %v1209 = vmul.f32 %v1208, %v1102
    %v1210 = vmul.f32 %v1209, %v1208
    %v1211 = vmul.f32 0.5, %v1210
    %v1212 = vsub.f32 1.5, %v1211
    %v1213 = vmul.f32 %v1208, %v1212
    %vm1214 = vweird.f32 %v1102
    %vm1215 = vweird.f32 %v1208
    %vm1216 = vmor %vm1214, %vm1215
    %v1217 = vsel %vm1216, %v1208, %v1213
    %v1218 = vrsqrt.pop %v1103
    %v1219 = vmul.f32 %v1218, %v1103
    %v1220 = vmul.f32 %v1219, %v1218
    %v1221 = vmul.f32 0.5, %v1220
    %v1222 = vsub.f32 1.5, %v1221
    %v1223 = vmul.f32 %v1218, %v1222
    %vm1224 = vweird.f32 %v1103
    %vm1225 = vweird.f32 %v1218
    %vm1226 = vmor %vm1224, %vm1225
    %v1227 = vsel %vm1226, %v1218, %v1223
    %v1228 = vrsqrt.pop %v1104
    %v1229 = vmul.f32 %v1228, %v1104
    %v1230 = vmul.f32 %v1229, %v1228
    %v1231 = vmul.f32 0.5, %v1230
    %v1232 = vsub.f32 1.5, %v1231
    %v1233 = vmul.f32 %v1228, %v1232
    %vm1234 = vweird.f32 %v1104
    %vm1235 = vweird.f32 %v1228
    %vm1236 = vmor %vm1234, %vm1235
    %v1237 = vsel %vm1236, %v1228, %v1233
    %v1238 = vrsqrt.pop %v1105
    %v1239 = vmul.f32 %v1238, %v1105
    %v1240 = vmul.f32 %v1239, %v1238
    %v1241 = vmul.f32 0.5, %v1240
    %v1242 = vsub.f32 1.5, %v1241
    %v1243 = vmul.f32 %v1238, %v1242
    %vm1244 = vweird.f32 %v1105
    %vm1245 = vweird.f32 %v1238
    %vm1246 = vmor %vm1244, %vm1245
    %v1247 = vsel %vm1246, %v1238, %v1243
    %v1248 = vrsqrt.pop %v1106
    %v1249 = vmul.f32 %v1248, %v1106
    %v1250 = vmul.f32 %v1249, %v1248
    %v1251 = vmul.f32 0.5, %v1250
    %v1252 = vsub.f32 1.5, %v1251
    %v1253 = vmul.f32 %v1248, %v1252
    %vm1254 = vweird.f32 %v1106
    %vm1255 = vweird.f32 %v1248
    %vm1256 = vmor %vm1254, %vm1255
    %v1257 = vsel %vm1256, %v1248, %v1253
    %v1258 = vrsqrt.pop %v1107
    %v1259 = vmul.f32 %v1258, %v1107
    %v1260 = vmul.f32 %v1259, %v1258
    %v1261 = vmul.f32 0.5, %v1260
    %v1262 = vsub.f32 1.5, %v1261
    %v1263 = vmul.f32 %v1258, %v1262
    %vm1264 = vweird.f32 %v1107
    %vm1265 = vweird.f32 %v1258
    %vm1266 = vmor %vm1264, %vm1265
    %v1267 = vsel %vm1266, %v1258, %v1263
    %v1268 = vmul.f32 %v1117, 0.996
    %v1269 = vmul.f32 %v1127, 0.996
    %v1270 = vmul.f32 %v1137, 0.996
    %v1271 = vmul.f32 %v1147, 0.996
    %v1272 = vmul.f32 %v1157, 0.996
    %v1273 = vmul.f32 %v1167, 0.996
    %v1274 = vmul.f32 %v1177, 0.996
    %v1275 = vmul.f32 %v1187, 0.996
    %v1276 = vmul.f32 %v1197, 0.996
    %v1277 = vmul.f32 %v1207, 0.996
    %v1278 = vmul.f32 %v1217, 0.996
    %v1279 = vmul.f32 %v1227, 0.996
    %v1280 = vmul.f32 %v1237, 0.996
    %v1281 = vmul.f32 %v1247, 0.996
    %v1282 = vmul.f32 %v1257, 0.996
    %v1283 = vmul.f32 %v1267, 0.996
    %v1284 = vsel %vm1076, %v1268, %v1028
    %v1285 = vsel %vm1077, %v1269, %v1029
    %v1286 = vsel %vm1078, %v1270, %v1030
    %v1287 = vsel %vm1079, %v1271, %v1031
    %v1288 = vsel %vm1080, %v1272, %v1032
    %v1289 = vsel %vm1081, %v1273, %v1033
    %v1290 = vsel %vm1082, %v1274, %v1034
    %v1291 = vsel %vm1083, %v1275, %v1035
    %v1292 = vsel %vm1084, %v1276, %v1036
    %v1293 = vsel %vm1085, %v1277, %v1037
    %v1294 = vsel %vm1086, %v1278, %v1038
    %v1295 = vsel %vm1087, %v1279, %v1039
    %v1296 = vsel %vm1088, %v1280, %v1040
    %v1297 = vsel %vm1089, %v1281, %v1041
    %v1298 = vsel %vm1090, %v1282, %v1042
    %v1299 = vsel %vm1091, %v1283, %v1043
    %v1300 = vmul.f32 %v740, %v1284
    %v1301 = vmul.f32 %v741, %v1285
    %v1302 = vmul.f32 %v742, %v1286
    %v1303 = vmul.f32 %v743, %v1287
    %v1304 = vmul.f32 %v744, %v1288
    %v1305 = vmul.f32 %v745, %v1289
    %v1306 = vmul.f32 %v746, %v1290
    %v1307 = vmul.f32 %v747, %v1291
    %v1308 = vmul.f32 %v748, %v1292
    %v1309 = vmul.f32 %v749, %v1293
    %v1310 = vmul.f32 %v750, %v1294
    %v1311 = vmul.f32 %v751, %v1295
    %v1312 = vmul.f32 %v752, %v1296
    %v1313 = vmul.f32 %v753, %v1297
    %v1314 = vmul.f32 %v754, %v1298
    %v1315 = vmul.f32 %v755, %v1299
    %1316 = vst [vmem:[#allocation2] sm:$0xff] %v1300
    %1317 = vst [vmem:[#allocation2 + $0x8] sm:$0xff] %v1301
    %1318 = vst [vmem:[#allocation2 + $0x10] sm:$0xff] %v1302
    %1319 = vst [vmem:[#allocation2 + $0x18] sm:$0xff] %v1303
    %1320 = vst [vmem:[#allocation2 + $0x20] sm:$0xff] %v1304
    %1321 = vst [vmem:[#allocation2 + $0x28] sm:$0xff] %v1305
    %1322 = vst [vmem:[#allocation2 + $0x30] sm:$0xff] %v1306
    %1323 = vst [vmem:[#allocation2 + $0x38] sm:$0xff] %v1307
    %1324 = vst [vmem:[#allocation2 + $0x40] sm:$0xff] %v1308
    %1325 = vst [vmem:[#allocation2 + $0x48] sm:$0xff] %v1309
    %1326 = vst [vmem:[#allocation2 + $0x50] sm:$0xff] %v1310
    %1327 = vst [vmem:[#allocation2 + $0x58] sm:$0xff] %v1311
    %1328 = vst [vmem:[#allocation2 + $0x60] sm:$0xff] %v1312
    %1329 = vst [vmem:[#allocation2 + $0x68] sm:$0xff] %v1313
    %1330 = vst [vmem:[#allocation2 + $0x70] sm:$0xff] %v1314
    %1331 = vst [vmem:[#allocation2 + $0x78] sm:$0xff] %v1315
    // Predicated region
    $region22: #{tpu_custom_call.1} parent=1 // pred_check
      _
    $region23: #{tpu_custom_call.1} parent=1 // pred_check_branch
      %1333 = sbr.rel (0) target = $region25
    $region24: #{tpu_custom_call.1} parent=1 // pred_region
      %1335 = vsyncadd [#allocation3], 0
      %s1336 = sshll.u32 [#allocation2], 4
      %s1337 = int_to_ptr.vmem [resolvable:$true] %s1336
      %s1338 = sshll.u32 %s5, 4
      %s1339 = int_to_ptr.hbm [resolvable:$true] %s1338
      %1344 = dma.vmem_to_hbm [thread:$0]  %s1337, 2048, %s1339, [#allocation3], 128, 128, 8
    $region25: #{tpu_custom_call.1} parent=1 // pred_fallthru
      _
    // Predicated region
    $region26: #{tpu_custom_call.1} parent=1 // pred_check
      _
    $region27: #{tpu_custom_call.1} parent=1 // pred_check_branch
      %1346 = sbr.rel (0) target = $region29
    $region28: #{tpu_custom_call.1} parent=1 // pred_region
      %1348 = dma.done [#allocation3], 2048
    $region29: #{tpu_custom_call.1} parent=1 // pred_fallthru
      _
    %1349 = vsyncpa [#allocation3], 1

</llo_original>
